<compile_context>
chip_gen: v7x
topology: tpu7x:2x2x1
jax: 0.10.0
libtpu: 0.0.40
codegen_flags: <defaults>
</compile_context>

<pallas_src>
import functools

import jax
import jax.numpy as jnp
from jax.experimental import pallas as pl
from jax.experimental.pallas import tpu as pltpu


def _round_up(x, m):
    return (x + m - 1) // m * m


def _qnet_kernel(x_ref, w1_ref, w2_ref, o_ref):
    # Layer 1: bias is folded into W1 via the ones-column of x (augmented form).
    h = jnp.dot(x_ref[...], w1_ref[...], preferred_element_type=jnp.float32)
    h = jnp.maximum(h, 0.0)  # constant-1 hidden unit survives ReLU
    # Layer 2: bias folded into W2 via the constant-1 hidden unit. f32 throughout.
    out = jnp.dot(h, w2_ref[...], preferred_element_type=jnp.float32)
    o_ref[...] = out.astype(o_ref.dtype)


def prepare_params(w1, b1, w2, b2, dtype=jnp.float32):
    """Pad + augment raw params into bias-folded, MXU/vreg-friendly matrices.

    w1: (in, hid), b1: (hid,), w2: (hid, out), b2: (out,)  (pre-transposed layout)
    Returns (w1_aug, w2_aug, dims) with
      w1_aug: (in_p, hid_p)   row `in`  holds b1; column `hid` makes a constant-1 unit
      w2_aug: (hid_p, out_p)  row `hid` holds b2
    All other padding is zero, so padded rows/cols contribute exactly 0 and the
    math matches the PyTorch module bit-for-bit up to summation order.
    """
    in_dim, hid = w1.shape
    out_dim = w2.shape[1]
    in_p = _round_up(in_dim + 1, 8)            # sublane-aligned (lane dim of x = full)
    hid_p = _round_up(hid + 1, 128)            # lane-aligned hidden
    out_p = _round_up(max(out_dim, 128), 128)  # lane-dense output (no vst.msk)

    w1_aug = jnp.zeros((in_p, hid_p), dtype)
    w1_aug = w1_aug.at[:in_dim, :hid].set(w1.astype(dtype))
    w1_aug = w1_aug.at[in_dim, :hid].set(b1.astype(dtype))  # bias row (hit by ones col)
    w1_aug = w1_aug.at[in_dim, hid].set(1.0)                 # constant-1 hidden unit

    w2_aug = jnp.zeros((hid_p, out_p), dtype)
    w2_aug = w2_aug.at[:hid, :out_dim].set(w2.astype(dtype))
    w2_aug = w2_aug.at[hid, :out_dim].set(b2.astype(dtype))  # bias row
    return w1_aug, w2_aug, (in_dim, hid, out_dim, in_p, hid_p, out_p)


@functools.partial(jax.jit, static_argnames=("dims", "tile_b"))
def linear_qnet_forward(x, w1_aug, w2_aug, *, dims, tile_b=512):
    """x: (B, in) f32. Returns (B, out) f32 = relu(x @ W1 + b1) @ W2 + b2."""
    in_dim, hid, out_dim, in_p, hid_p, out_p = dims
    B = x.shape[0]

    # Batch tile: multiple of 8 sublanes; large tiles amortize per-step overhead.
    tb = min(_round_up(tile_b, 8), _round_up(B, 8))
    B_pad = _round_up(B, tb)

    # Augment with the ones column (drives bias rows), then zero-pad to tile shape.
    ones = jnp.ones((B, 1), x.dtype)
    x_aug = jnp.concatenate([x, ones], axis=1)              # (B, in_dim + 1)
    x_pad = jnp.pad(x_aug, ((0, B_pad - B), (0, in_p - (in_dim + 1))))

    grid = (B_pad // tb,)
    out_pad = pl.pallas_call(
        _qnet_kernel,
        out_shape=jax.ShapeDtypeStruct((B_pad, out_p), x.dtype),
        grid=grid,
        in_specs=[
            pl.BlockSpec((tb, in_p), lambda i: (i, 0)),      # batch-tiled activations
            pl.BlockSpec((in_p, hid_p), lambda i: (0, 0)),   # weights resident across grid
            pl.BlockSpec((hid_p, out_p), lambda i: (0, 0)),
        ],
        out_specs=pl.BlockSpec((tb, out_p), lambda i: (i, 0)),
        compiler_params=pltpu.CompilerParams(
            dimension_semantics=("parallel",),    # shard batch grid across 2 TCs on v7x
            vmem_limit_bytes=32 * 1024 * 1024,    # fits v5e/v6e/v7x scoped VMEM
        ),
    )(x_pad, w1_aug, w2_aug)
    return out_pad[:B, :out_dim]


if __name__ == "__main__":
    # Snake Q-net dims kept small: 11 state features, hidden=32, 3 actions.
    batch, input_size, hidden_size, output_size = 8, 11, 32, 3

    key = jax.random.PRNGKey(0)
    kx, k1, k2, k3, k4 = jax.random.split(key, 5)

    # nn.Linear-style uniform(-1/sqrt(fan_in), 1/sqrt(fan_in)) init,
    # stored pre-transposed as (in, out) + 1-D biases.
    bound1 = 1.0 / (input_size ** 0.5)
    bound2 = 1.0 / (hidden_size ** 0.5)
    w1 = jax.random.uniform(k1, (input_size, hidden_size), jnp.float32, -bound1, bound1)
    b1 = jax.random.uniform(k2, (hidden_size,), jnp.float32, -bound1, bound1)
    w2 = jax.random.uniform(k3, (hidden_size, output_size), jnp.float32, -bound2, bound2)
    b2 = jax.random.uniform(k4, (output_size,), jnp.float32, -bound2, bound2)

    x = jax.random.normal(kx, (batch, input_size), jnp.float32)

    w1_aug, w2_aug, dims = prepare_params(w1, b1, w2, b2)
    out = linear_qnet_forward(x, w1_aug, w2_aug, dims=dims)
    out = jax.block_until_ready(out)

    # Reference check in plain JAX (same math as the PyTorch forward).
    ref = jnp.maximum(x @ w1 + b1, 0.0) @ w2 + b2
    assert out.shape == (batch, output_size)
    assert jnp.allclose(out, ref, atol=1e-5, rtol=1e-5), float(jnp.max(jnp.abs(out - ref)))

    print("KERNEL_OK")
</pallas_src>

<mosaic_0001>
module attributes {stable_mosaic.version = 11 : i64} {
  func.func @_qnet_kernel(%arg0: i32, %arg1: memref<8x16xf32, #tpu.memory_space<vmem>>, %arg2: memref<16x128xf32, #tpu.memory_space<vmem>>, %arg3: memref<128x128xf32, #tpu.memory_space<vmem>>, %arg4: memref<8x128xf32, #tpu.memory_space<vmem>>) attributes {dimension_semantics = [#tpu.dimension_semantics<parallel>], iteration_bounds = array<i64: 1>, scalar_prefetch = 0 : i64, scratch_operands = 0 : i64, tpu.core_type = #tpu.core_type<tc>, window_params = [{transform_indices = @transform_0, window_bounds = array<i64: 8, 16>}, {pipeline_mode = #tpu.pipeline_mode<synchronous>, transform_indices = @transform_1, window_bounds = array<i64: 16, 128>}, {pipeline_mode = #tpu.pipeline_mode<synchronous>, transform_indices = @transform_2, window_bounds = array<i64: 128, 128>}, {transform_indices = @transform_3, window_bounds = array<i64: 8, 128>}]} {
    %c0 = arith.constant 0 : index
    %c0_0 = arith.constant 0 : index
    %0 = vector.load %arg1[%c0, %c0_0] : memref<8x16xf32, #tpu.memory_space<vmem>>, vector<8x16xf32>
    %c0_1 = arith.constant 0 : index
    %c0_2 = arith.constant 0 : index
    %1 = vector.load %arg2[%c0_1, %c0_2] : memref<16x128xf32, #tpu.memory_space<vmem>>, vector<16x128xf32>
    %cst = arith.constant dense<0.000000e+00> : vector<8x128xf32>
    %2 = tpu.matmul %0, %1, %cst {dimension_numbers = #tpu.dot_dimension_numbers<[1], [0], [0], [1], [0, 0, 1, 1], [], []>} : vector<8x16xf32>, vector<16x128xf32>, vector<8x128xf32> -> vector<8x128xf32>
    %cst_3 = arith.constant 0.000000e+00 : f32
    %3 = vector.broadcast %cst_3 : f32 to vector<8x128xf32>
    %4 = arith.maximumf %2, %3 : vector<8x128xf32>
    %c0_4 = arith.constant 0 : index
    %c0_5 = arith.constant 0 : index
    %5 = vector.load %arg3[%c0_4, %c0_5] : memref<128x128xf32, #tpu.memory_space<vmem>>, vector<128x128xf32>
    %cst_6 = arith.constant dense<0.000000e+00> : vector<8x128xf32>
    %6 = tpu.matmul %4, %5, %cst_6 {dimension_numbers = #tpu.dot_dimension_numbers<[1], [0], [0], [1], [0, 0, 1, 1], [], []>} : vector<8x128xf32>, vector<128x128xf32>, vector<8x128xf32> -> vector<8x128xf32>
    %c0_7 = arith.constant 0 : index
    %c0_8 = arith.constant 0 : index
    %7 = vector.load %arg4[%c0_7, %c0_8] : memref<8x128xf32, #tpu.memory_space<vmem>>, vector<8x128xf32>
    tpu.vector_store %arg4[%c0_7, %c0_8], %6 {strides = array<i32>} : memref<8x128xf32, #tpu.memory_space<vmem>>, vector<8x128xf32>,
    return
  }
  func.func @transform_0(%arg0: i32) -> (i32, i32) {
    %c0_i32 = arith.constant 0 : i32
    %c0_i32_0 = arith.constant 0 : i32
    return %arg0, %c0_i32 : i32, i32
  }
  func.func @transform_1(%arg0: i32) -> (i32, i32) {
    %c0_i32 = arith.constant 0 : i32
    %c0_i32_0 = arith.constant 0 : i32
    %c0_i32_1 = arith.constant 0 : i32
    return %c0_i32, %c0_i32_0 : i32, i32
  }
  func.func @transform_2(%arg0: i32) -> (i32, i32) {
    %c0_i32 = arith.constant 0 : i32
    %c0_i32_0 = arith.constant 0 : i32
    %c0_i32_1 = arith.constant 0 : i32
    return %c0_i32, %c0_i32_0 : i32, i32
  }
  func.func @transform_3(%arg0: i32) -> (i32, i32) {
    %c0_i32 = arith.constant 0 : i32
    %c0_i32_0 = arith.constant 0 : i32
    return %arg0, %c0_i32 : i32, i32
  }
}

</mosaic_0001>

<llo_original>
// kernel: linear_qnet_forward.1
$region0: #{linear_qnet_forward.1}
  #allocation0 [shape = 'u32[]', space=smem, size = 0x4, offset = 0x4, fixed_abs, tag = 'smem constant byte address 0x4 - core index']
  #allocation1 [shape = 'u32[144,128]{1,0:T(1,128)}', space=vmem, size = 0x12000, scoped, tag = 'internal scratch']
  %s0 = inlined_call_operand.vmem [shape: f32[8,16], index: 0, kind: input, shape index: {}]
  %s1 = inlined_call_operand.vmem [shape: f32[16,128], index: 1, kind: input, shape index: {}]
  %s2 = inlined_call_operand.hbm [shape: f32[128,128], index: 2, kind: input, shape index: {}]
  %s3 = inlined_call_operand.vmem [shape: f32[8,128], index: 3, kind: output, shape index: {}]
  %s4 = sld [smem:[#allocation0]]
  $region26: #{linear_qnet_forward.1} parent=0
    _
  %s6 = ssub.s32 1, %s4
  %s7 = scalar_select 0, %s6, %s4
  $region1: #{linear_qnet_forward.1} parent=0
    #allocation2 [shape = 'u8[65536]{0}', space=vmem, size = 0x10000, scoped, tag = 'input window, operand 2, single buffered']
    #allocation3 [shape = 's32[1]{0}', space=sflag, size = 0x4, scoped, tag = 'scoped memory for linear_qnet_forward.1']
    %8 = vsyncpa [#allocation3], 0
    // Predicated region
    $region2: #{linear_qnet_forward.1} parent=1 // pred_check
      _
    $region3: #{linear_qnet_forward.1} parent=1 // pred_check_branch
      %10 = sbr.rel (0) target = $region5
    $region4: #{linear_qnet_forward.1} parent=1 // pred_region
      _
    $region5: #{linear_qnet_forward.1} parent=1 // pred_fallthru
      _
    // Predicated region
    $region6: #{linear_qnet_forward.1} parent=1 // pred_check
      _
    $region7: #{linear_qnet_forward.1} parent=1 // pred_check_branch
      %12 = sbr.rel (0) target = $region9
    $region8: #{linear_qnet_forward.1} parent=1 // pred_region
      _
    $region9: #{linear_qnet_forward.1} parent=1 // pred_fallthru
      _
    // Predicated region
    $region10: #{linear_qnet_forward.1} parent=1 // pred_check
      _
    $region11: #{linear_qnet_forward.1} parent=1 // pred_check_branch
      %14 = sbr.rel (0) target = $region13
    $region12: #{linear_qnet_forward.1} parent=1 // pred_region
      %s16 = ssub.s32 2048, 2048
      %17 = vsyncadd [#allocation3], %s16
      %s18 = sshll.u32 [#allocation2], 4
      %s19 = int_to_ptr.vmem [resolvable:$true] %s18
      %24 = dma.hbm_to_vmem [thread:$0]  %s2, 2048, %s19, [#allocation3], 128, 128, 8
    $region13: #{linear_qnet_forward.1} parent=1 // pred_fallthru
      _
    // Predicated region
    $region14: #{linear_qnet_forward.1} parent=1 // pred_check
      _
    $region15: #{linear_qnet_forward.1} parent=1 // pred_check_branch
      %26 = sbr.rel (0) target = $region17
    $region16: #{linear_qnet_forward.1} parent=1 // pred_region
      %27 = dma.done [#allocation3], 2048
    $region17: #{linear_qnet_forward.1} parent=1 // pred_fallthru
      _
    %v28 = vld [vmem:[%s0] sm:$0xff]
    %v29 = vld [vmem:[%s1] sm:$0xff]
    %v30 = vld [vmem:[%s1 + $0x8] sm:$0xff]
    %vm31 = vcmask 130048
    %v33 = vsel %vm31, %v28, 0
    %35 = vmatprep.subr.mxu0 0.0
    %36 = vmatpush1.msra.mxu0 %v29
    %37 = vmatprep.subr.mxu0 0.0
    %38 = vmatpush1.msra.mxu0 %v30
    %39 = vmatprep.subr.mxu0 0.0
    %40 = vmatpush1.msra.mxu0 0.0
    %41 = vmatprep.subr.mxu0 0.0
    %42 = vmatpush1.msra.mxu0 0.0
    %43 = vmatprep.subr.mxu0 0.0
    %44 = vmatpush1.msra.mxu0 0.0
    %45 = vmatprep.subr.mxu0 0.0
    %46 = vmatpush1.msra.mxu0 0.0
    %47 = vmatprep.subr.mxu0 0.0
    %48 = vmatpush1.msra.mxu0 0.0
    %49 = vmatprep.subr.mxu0 0.0
    %50 = vmatpush1.msra.mxu0 0.0
    %51 = vmatprep.subr.mxu0 0.0
    %52 = vmatpush1.msra.mxu0 0.0
    %53 = vmatprep.subr.mxu0 0.0
    %54 = vmatpush1.msra.mxu0 0.0
    %55 = vmatprep.subr.mxu0 0.0
    %56 = vmatpush1.msra.mxu0 0.0
    %57 = vmatprep.subr.mxu0 0.0
    %58 = vmatpush1.msra.mxu0 0.0
    %59 = vmatprep.subr.mxu0 0.0
    %60 = vmatpush1.msra.mxu0 0.0
    %61 = vmatprep.subr.mxu0 0.0
    %62 = vmatpush1.msra.mxu0 0.0
    %63 = vmatprep.subr.mxu0 0.0
    %64 = vmatpush1.msra.mxu0 0.0
    %65 = vmatprep.subr.mxu0 0.0
    %66 = vmatpush1.msra.mxu0 0.0
    %67 = vmatprep.subr.mxu0 0.0
    %68 = vmatpush1.msra.mxu0 0.0
    %69 = vmatprep.subr.mxu0 0.0
    %70 = vmatpush1.msra.mxu0 0.0
    %71 = vmatprep.subr.mxu0 0.0
    %72 = vmatpush1.msra.mxu0 0.0
    %73 = vmatprep.subr.mxu0 0.0
    %74 = vmatpush1.msra.mxu0 0.0
    %75 = vmatprep.subr.mxu0 0.0
    %76 = vmatpush1.msra.mxu0 0.0
    %77 = vmatprep.subr.mxu0 0.0
    %78 = vmatpush1.msra.mxu0 0.0
    %79 = vmatprep.subr.mxu0 0.0
    %80 = vmatpush1.msra.mxu0 0.0
    %81 = vmatprep.subr.mxu0 0.0
    %82 = vmatpush1.msra.mxu0 0.0
    %83 = vmatprep.subr.mxu0 0.0
    %84 = vmatpush1.msra.mxu0 0.0
    %85 = vmatprep.subr.mxu0 0.0
    %86 = vmatpush1.msra.mxu0 0.0
    %87 = vmatprep.subr.mxu0 0.0
    %88 = vmatpush1.msra.mxu0 0.0
    %89 = vmatprep.subr.mxu0 0.0
    %90 = vmatpush1.msra.mxu0 0.0
    %91 = vmatprep.subr.mxu0 0.0
    %92 = vmatpush1.msra.mxu0 0.0
    %93 = vmatprep.subr.mxu0 0.0
    %94 = vmatpush1.msra.mxu0 0.0
    %95 = vmatprep.subr.mxu0 0.0
    %96 = vmatpush1.msra.mxu0 0.0
    %97 = vmatprep.subr.mxu0 0.0
    %98 = vmatpush1.msra.mxu0 0.0
    %99 = vmatprep.mubr.f32.mxu0 0.0
    %100 = vmatmul.mubr.f32.gmra.mrb[0].mxu0 %v33
    %v101 = vpop.f32.mrb[0].mxu0
    %v102 = vadd.f32 0.0, %v101
    %v103 = vpop.f32.mrb[0].mxu0
    %104 = vdwg.mxu0
    %v105 = vmax.f32 %v102, 0.0
    %v106 = vld [vmem:[#allocation2] sm:$0xff]
    %v107 = vld [vmem:[#allocation2 + $0x8] sm:$0xff]
    %v108 = vld [vmem:[#allocation2 + $0x10] sm:$0xff]
    %v109 = vld [vmem:[#allocation2 + $0x18] sm:$0xff]
    %v110 = vld [vmem:[#allocation2 + $0x20] sm:$0xff]
    %v111 = vld [vmem:[#allocation2 + $0x28] sm:$0xff]
    %v112 = vld [vmem:[#allocation2 + $0x30] sm:$0xff]
    %v113 = vld [vmem:[#allocation2 + $0x38] sm:$0xff]
    %v114 = vld [vmem:[#allocation2 + $0x40] sm:$0xff]
    %v115 = vld [vmem:[#allocation2 + $0x48] sm:$0xff]
    %v116 = vld [vmem:[#allocation2 + $0x50] sm:$0xff]
    %v117 = vld [vmem:[#allocation2 + $0x58] sm:$0xff]
    %v118 = vld [vmem:[#allocation2 + $0x60] sm:$0xff]
    %v119 = vld [vmem:[#allocation2 + $0x68] sm:$0xff]
    %v120 = vld [vmem:[#allocation2 + $0x70] sm:$0xff]
    %v121 = vld [vmem:[#allocation2 + $0x78] sm:$0xff]
    %122 = vmatprep.subr.mxu0 0.0
    %123 = vmatpush1.msra.mxu0 %v106
    %124 = vmatprep.subr.mxu0 0.0
    %125 = vmatpush1.msra.mxu0 %v107
    %126 = vmatprep.subr.mxu0 0.0
    %127 = vmatpush1.msra.mxu0 %v108
    %128 = vmatprep.subr.mxu0 0.0
    %129 = vmatpush1.msra.mxu0 %v109
    %130 = vmatprep.subr.mxu0 0.0
    %131 = vmatpush1.msra.mxu0 %v110
    %132 = vmatprep.subr.mxu0 0.0
    %133 = vmatpush1.msra.mxu0 %v111
    %134 = vmatprep.subr.mxu0 0.0
    %135 = vmatpush1.msra.mxu0 %v112
    %136 = vmatprep.subr.mxu0 0.0
    %137 = vmatpush1.msra.mxu0 %v113
    %138 = vmatprep.subr.mxu0 0.0
    %139 = vmatpush1.msra.mxu0 %v114
    %140 = vmatprep.subr.mxu0 0.0
    %141 = vmatpush1.msra.mxu0 %v115
    %142 = vmatprep.subr.mxu0 0.0
    %143 = vmatpush1.msra.mxu0 %v116
    %144 = vmatprep.subr.mxu0 0.0
    %145 = vmatpush1.msra.mxu0 %v117
    %146 = vmatprep.subr.mxu0 0.0
    %147 = vmatpush1.msra.mxu0 %v118
    %148 = vmatprep.subr.mxu0 0.0
    %149 = vmatpush1.msra.mxu0 %v119
    %150 = vmatprep.subr.mxu0 0.0
    %151 = vmatpush1.msra.mxu0 %v120
    %152 = vmatprep.subr.mxu0 0.0
    %153 = vmatpush1.msra.mxu0 %v121
    %154 = vmatprep.subr.mxu0 0.0
    %155 = vmatpush1.msra.mxu0 0.0
    %156 = vmatprep.subr.mxu0 0.0
    %157 = vmatpush1.msra.mxu0 0.0
    %158 = vmatprep.subr.mxu0 0.0
    %159 = vmatpush1.msra.mxu0 0.0
    %160 = vmatprep.subr.mxu0 0.0
    %161 = vmatpush1.msra.mxu0 0.0
    %162 = vmatprep.subr.mxu0 0.0
    %163 = vmatpush1.msra.mxu0 0.0
    %164 = vmatprep.subr.mxu0 0.0
    %165 = vmatpush1.msra.mxu0 0.0
    %166 = vmatprep.subr.mxu0 0.0
    %167 = vmatpush1.msra.mxu0 0.0
    %168 = vmatprep.subr.mxu0 0.0
    %169 = vmatpush1.msra.mxu0 0.0
    %170 = vmatprep.subr.mxu0 0.0
    %171 = vmatpush1.msra.mxu0 0.0
    %172 = vmatprep.subr.mxu0 0.0
    %173 = vmatpush1.msra.mxu0 0.0
    %174 = vmatprep.subr.mxu0 0.0
    %175 = vmatpush1.msra.mxu0 0.0
    %176 = vmatprep.subr.mxu0 0.0
    %177 = vmatpush1.msra.mxu0 0.0
    %178 = vmatprep.subr.mxu0 0.0
    %179 = vmatpush1.msra.mxu0 0.0
    %180 = vmatprep.subr.mxu0 0.0
    %181 = vmatpush1.msra.mxu0 0.0
    %182 = vmatprep.subr.mxu0 0.0
    %183 = vmatpush1.msra.mxu0 0.0
    %184 = vmatprep.subr.mxu0 0.0
    %185 = vmatpush1.msra.mxu0 0.0
    %186 = vmatprep.mubr.f32.mxu0 0.0
    %187 = vmatmul.mubr.f32.gmra.mrb[0].mxu0 %v105
    %v188 = vpop.f32.mrb[0].mxu0
    %v189 = vadd.f32 0.0, %v188
    %v190 = vpop.f32.mrb[0].mxu0
    %191 = vdwg.mxu0
    %192 = vst [vmem:[%s3] sm:$0xff] %v189
    // Predicated region
    $region18: #{linear_qnet_forward.1} parent=1 // pred_check
      _
    $region19: #{linear_qnet_forward.1} parent=1 // pred_check_branch
      %194 = sbr.rel (0) target = $region21
    $region20: #{linear_qnet_forward.1} parent=1 // pred_region
      _
    $region21: #{linear_qnet_forward.1} parent=1 // pred_fallthru
      _
    // Predicated region
    $region22: #{linear_qnet_forward.1} parent=1 // pred_check
      _
    $region23: #{linear_qnet_forward.1} parent=1 // pred_check_branch
      %196 = sbr.rel (0) target = $region25
    $region24: #{linear_qnet_forward.1} parent=1 // pred_region
      _
    $region25: #{linear_qnet_forward.1} parent=1 // pred_fallthru
      _
    %197 = vsyncpa [#allocation3], 1

</llo_original>
